<compile_context>
chip_gen: v6e
topology: v6e:2x2x1
jax: 0.10.0
libtpu: 0.0.40
codegen_flags: <defaults>
</compile_context>

<pallas_src>
import functools

import jax
import jax.numpy as jnp
from jax import lax
from jax.experimental import pallas as pl
from jax.experimental.pallas import tpu as pltpu

# ----------------------------- constants -------------------------------------
num_fg_types = 4
num_aa_types = 8
num_atom_types = 4
num_total_type = num_fg_types + num_aa_types + num_atom_types  # 16
NUM_STEPS = 100

LANES = 128             # TPU lane width; node axis is padded to a lane multiple
DEFAULT_TILE_M = 4096   # nodes per grid step (sweep 2048-8192)

# f32 aux-slab row layout (per-node scalars the losses need at full precision)
AUX_VN = 0     # v_noisy        (3 rows)
AUX_V0 = 3     # v_0            (3 rows)
AUX_EP = 6     # eps_p target   (3 rows)
AUX_TGT = 9    # type target    (1 row)
AUX_RM = 10    # rot loss mask  (1 row)
AUX_PM = 11    # pos loss mask  (1 row)
AUX_TM = 12    # type loss mask (1 row)
AUX_MG = 13    # mask_generate  (1 row)
N_AUX = 14
N_AUX_PAD = 16


def _round_up(x, m):
    return (x + m - 1) // m * m


# -------------------- fused eps-net + loss Pallas kernel ----------------------
def _fgdpm_fused_kernel(feat_ref, aux_ref, w1t_ref, b1_ref, w2t_ref, b2_ref, out_ref,
                        *, n_classes, vd_off, ep_off):
    """One node tile: eps-net MLP + rotation/position/type losses -> partial sums."""
    aux = aux_ref[...]                                            # (16, T) f32

    # ---- eps-net MLP on the MXU: bf16 operands, f32 accumulation --------------
    h = jnp.dot(w1t_ref[...], feat_ref[...],
                preferred_element_type=jnp.float32)               # (32, T)
    h = jnp.tanh(h + b1_ref[...])
    y = jnp.dot(w2t_ref[...], h.astype(jnp.bfloat16),
                preferred_element_type=jnp.float32) + b2_ref[...]  # (32, T)

    gen = aux[AUX_MG:AUX_MG + 1, :] > 0.5                         # (1, T), hoisted once

    # v_pred = where(mask_generate, v_delta, v_noisy); eps_p_pred masked to 0 outside.
    v_pred = jnp.where(gen, y[vd_off:vd_off + 3, :], aux[AUX_VN:AUX_VN + 3, :])   # (3, T)
    e_pred = jnp.where(gen, y[ep_off:ep_off + 3, :], 0.0)                          # (3, T)
    v_true = aux[AUX_V0:AUX_V0 + 3, :]                                             # (3, T)

    # ---- rotation cosine loss via the Rodrigues/Frobenius trace identity ------
    # rotation_matrix_cosine_loss(R_p, R_0) = sum_c (1 - cos_sim(R_p[:,c], R_0[:,c])).
    # Rodrigues columns are exactly unit-norm, so the column-dot sum equals
    # trace(R_p^T R_0); with R = cosT*I + sinT*[u]x + (1-cosT)*uu^T the Frobenius
    # products of the building blocks give
    #   trace(R_p^T R_0) = 3 cp c0 + cp t0 + tp c0 + 2 sp s0 d + tp t0 d^2,   d = up.u0
    # (the reference's eps-clamped column-norm denominators only differ at fp epsilon).
    def _angle(v):
        t2 = jnp.sum(v * v, axis=0, keepdims=True)                # theta^2, (1, T)
        inv = lax.rsqrt(jnp.maximum(t2, 1e-16))                   # 1/max(theta,1e-8), EUP
        theta = t2 * inv
        c = jnp.cos(theta)
        return inv, jnp.sin(theta), c, 1.0 - c

    inv_p, s_p, c_p, t_p = _angle(v_pred)
    inv_0, s_0, c_0, t_0 = _angle(v_true)
    d = jnp.sum(v_pred * v_true, axis=0, keepdims=True) * (inv_p * inv_0)
    trace = (3.0 * c_p * c_0 + c_p * t_0 + t_p * c_0
             + 2.0 * s_p * s_0 * d + t_p * t_0 * d * d)
    rot_loss = 3.0 - trace                                        # (1, T)

    # ---- position MSE summed over xyz (sublane-packed) -------------------------
    dp = e_pred - aux[AUX_EP:AUX_EP + 3, :]
    pos_loss = jnp.sum(dp * dp, axis=0, keepdims=True)            # (1, T)

    # ---- type cross entropy (classes on the sublane axis) ----------------------
    logits = y[0:n_classes, :]                                    # (16, T)
    mmax = jnp.max(logits, axis=0, keepdims=True)
    lse = mmax + jnp.log(jnp.sum(jnp.exp(logits - mmax), axis=0, keepdims=True))
    cls = lax.broadcasted_iota(jnp.int32, logits.shape, 0).astype(jnp.float32)
    onehot = (cls == aux[AUX_TGT:AUX_TGT + 1, :]).astype(jnp.float32)
    type_loss = lse - jnp.sum(logits * onehot, axis=0, keepdims=True)

    # ---- per-tile partial sums (reduced across tiles in the JAX wrapper) -------
    rm = aux[AUX_RM:AUX_RM + 1, :]
    pm = aux[AUX_PM:AUX_PM + 1, :]
    tmk = aux[AUX_TM:AUX_TM + 1, :]
    zero = jnp.zeros((), jnp.float32)
    vals = [jnp.sum(rot_loss * rm), jnp.sum(rm),
            jnp.sum(pos_loss * pm), jnp.sum(pm),
            jnp.sum(type_loss * tmk), jnp.sum(tmk), zero, zero]
    out_ref[...] = jnp.concatenate(
        [jnp.broadcast_to(v, (1, LANES)) for v in vals], axis=0)  # (8, 128)


# ------------------------------ wrapper ---------------------------------------
def _channel_major(x):
    """(N, L, C) -> (C, N*L): per-component transpose, no full padded-slab transpose."""
    return jnp.moveaxis(x, -1, 0).reshape(x.shape[-1], -1)


def fgdpm_fused_losses(params, v_noisy, p_noisy, s_noisy, fg_feat, pair_feat, beta,
                       mask_generate, v_0, eps_p, s_target,
                       rot_mask, pos_mask, type_mask, *, tile_m=DEFAULT_TILE_M):
    N, L, _ = v_noisy.shape
    K = num_total_type
    M = N * L

    # eps-net input features (channel-major). TODO(synk): stream pair_feat through the
    # Pallas pipeline (second grid axis over L-chunks with a VMEM accumulator) for large L
    # instead of pooling it in XLA.
    pair_pooled = jnp.mean(pair_feat, axis=2)                         # (N, L, Dp)
    s_onehot = jax.nn.one_hot(s_noisy, K + 1, dtype=jnp.float32)      # absorb idx incl.
    beta_row = jnp.broadcast_to(beta.astype(jnp.float32)[:, None], (N, L)).reshape(1, M)
    feat_cm = jnp.concatenate([
        _channel_major(fg_feat.astype(jnp.float32)),
        _channel_major(p_noisy.astype(jnp.float32)),
        _channel_major(v_noisy.astype(jnp.float32)),
        _channel_major(s_onehot),
        beta_row,
        _channel_major(pair_pooled.astype(jnp.float32)),
    ], axis=0)                                                        # (d_feat, M)
    d_feat = feat_cm.shape[0]
    d_in, hidden = params['w1'].shape
    d_out = params['w2'].shape[1]
    assert d_in == d_feat, "w1 input dim must match the packed feature rows"

    one = lambda a: a.astype(jnp.float32).reshape(1, M)
    aux_cm = jnp.concatenate([
        _channel_major(v_noisy.astype(jnp.float32)),   # f32 copy for the non-generate branch
        _channel_major(v_0.astype(jnp.float32)),
        _channel_major(eps_p.astype(jnp.float32)),
        one(s_target), one(rot_mask), one(pos_mask), one(type_mask), one(mask_generate),
    ], axis=0)                                                        # (14, M)

    # Node axis on lanes; tile size is a lane multiple so every DMA is unmasked.
    tm = min(tile_m, _round_up(M, LANES))
    m_pad = _round_up(M, tm)
    num_tiles = m_pad // tm

    d_feat_pad = _round_up(d_feat, 16)        # bf16 sublane packing
    hidden_pad = _round_up(hidden, 16)
    d_out_pad = _round_up(d_out, 16)

    feat_slab = jnp.pad(feat_cm, ((0, d_feat_pad - d_feat), (0, m_pad - M))
                        ).astype(jnp.bfloat16)                        # (48, m_pad) bf16
    aux_slab = jnp.pad(aux_cm, ((0, N_AUX_PAD - N_AUX), (0, m_pad - M)))  # (16, m_pad) f32

    # Weights padded once to real (not 128x128) tiles; zero rows/cols keep padding inert.
    w1t = jnp.zeros((hidden_pad, d_feat_pad), jnp.float32).at[:hidden, :d_in].set(
        params['w1'].T).astype(jnp.bfloat16)
    w2t = jnp.zeros((d_out_pad, hidden_pad), jnp.float32).at[:d_out, :hidden].set(
        params['w2'].T).astype(jnp.bfloat16)
    b1c = jnp.zeros((hidden_pad, 1), jnp.float32).at[:hidden, 0].set(params['b1'][0])
    b2c = jnp.zeros((d_out_pad, 1), jnp.float32).at[:d_out, 0].set(params['b2'][0])

    kernel = functools.partial(_fgdpm_fused_kernel,
                               n_classes=K, vd_off=K, ep_off=K + 3)

    cost = pl.CostEstimate(
        flops=2 * m_pad * (hidden_pad * d_feat_pad + d_out_pad * hidden_pad),
        transcendentals=(hidden_pad + K + 8) * m_pad,
        bytes_accessed=(feat_slab.size * 2 + aux_slab.size * 4
                        + (w1t.size + w2t.size) * 2 + (b1c.size + b2c.size) * 4
                        + num_tiles * 8 * LANES * 4))

    partials = pl.pallas_call(
        kernel,
        out_shape=jax.ShapeDtypeStruct((num_tiles * 8, LANES), jnp.float32),
        grid=(num_tiles,),
        in_specs=[
            pl.BlockSpec((d_feat_pad, tm), lambda i: (0, i)),          # bf16 feature tile
            pl.BlockSpec((N_AUX_PAD, tm), lambda i: (0, i)),           # f32 aux tile
            pl.BlockSpec((hidden_pad, d_feat_pad), lambda i: (0, 0)),  # w1^T (resident)
            pl.BlockSpec((hidden_pad, 1), lambda i: (0, 0)),           # b1
            pl.BlockSpec((d_out_pad, hidden_pad), lambda i: (0, 0)),   # w2^T (resident)
            pl.BlockSpec((d_out_pad, 1), lambda i: (0, 0)),            # b2
        ],
        out_specs=pl.BlockSpec((8, LANES), lambda i: (i, 0)),
        compiler_params=pltpu.CompilerParams(
            dimension_semantics=("parallel",),            # megacore-shardable (v7x)
            vmem_limit_bytes=32 * 1024 * 1024),
        cost_estimate=cost,
    )(feat_slab, aux_slab, w1t, b1c, w2t, b2c)

    # Per-tile partials -> global masked means (matches a single global mean exactly).
    sums = jnp.sum(partials[:, 0].reshape(num_tiles, 8), axis=0)
    loss_rot = sums[0] / (sums[1] + 1e-8)
    loss_pos = sums[2] / (sums[3] + 1e-8)
    loss_type = sums[4] / (sums[5] + 1e-8)
    return loss_rot, loss_pos, loss_type


# ------------------------------ plain-JAX glue --------------------------------
def init_params(key, fg_feat_dim, pair_feat_dim, hidden=32):
    K = num_total_type
    d_in = fg_feat_dim + 3 + 3 + (K + 1) + 1 + pair_feat_dim   # 48 for the demo
    d_out = K + 3 + 3                # output channels: [type logits | v_delta | eps_p]
    k1, k2 = jax.random.split(key)
    w1 = jax.random.normal(k1, (d_in, hidden), jnp.float32) / jnp.sqrt(float(d_in))
    b1 = jnp.zeros((1, hidden), jnp.float32)
    w2 = jax.random.normal(k2, (hidden, d_out), jnp.float32) / jnp.sqrt(float(hidden))
    b2 = jnp.zeros((1, d_out), jnp.float32)
    betas = jnp.linspace(1e-4, 0.05, NUM_STEPS).astype(jnp.float32)
    alpha_bars = jnp.cumprod(1.0 - betas)
    return dict(
        w1=w1, b1=b1, w2=w2, b2=b2,
        betas=betas, alpha_bars=alpha_bars,
        position_mean=jnp.zeros((1, 1, 3), jnp.float32),
        position_scale=jnp.full((1, 1, 1), 10.0, jnp.float32),
    )


def fgdpm_forward(params, v_0, p_0, s_0, fg_feat, pair_feat,
                  mask_generate, mask_sample, key, t=None,
                  denoise_structure=True, denoise_type=True):
    N, L = s_0.shape
    k_t, k_v, k_p, k_s = jax.random.split(key, 4)
    if t is None:
        t = jax.random.randint(k_t, (N,), 0, NUM_STEPS)

    p_0n = (p_0 - params['position_mean']) / params['position_scale']

    a_bar = params['alpha_bars'][t]                      # (N,)
    c1 = jnp.sqrt(a_bar)[:, None, None]
    c2 = jnp.sqrt(1.0 - a_bar)[:, None, None]
    mg3 = mask_generate[:, :, None]

    if denoise_structure:
        # TODO(synk): RotationTransition uses IGSO(3) sampling; approximated here
        # with a Gaussian perturbation of the so(3) vector (same shapes/masking).
        e_v = jax.random.normal(k_v, v_0.shape, jnp.float32)
        v_noisy = jnp.where(mg3, c1 * v_0 + c2 * e_v, v_0)
        e_p = jax.random.normal(k_p, p_0n.shape, jnp.float32)
        p_noisy = jnp.where(mg3, c1 * p_0n + c2 * e_p, p_0n)
        eps_p = jnp.where(mg3, e_p, 0.0)
    else:
        v_noisy = v_0
        p_noisy = p_0n
        eps_p = jnp.zeros_like(p_noisy)
    rot_mask = (mask_generate & mask_sample).astype(jnp.float32)   # consider_single=True
    pos_mask = mask_generate.astype(jnp.float32)

    if denoise_type:
        # Absorbing-state type diffusion: corrupt generated tokens to the absorb idx.
        u = jax.random.uniform(k_s, s_0.shape)
        corrupt = (u < (1.0 - a_bar)[:, None]) & mask_generate
        s_noisy = jnp.where(corrupt, num_total_type, s_0)
    else:
        s_noisy = s_0
    # TODO(synk): PLTypeTransition's s_0_ignore / before_softmax definitions are
    # unavailable; the CE uses target = s_0 and the raw logits.
    s_0_ignore = s_0
    type_mask = mask_generate.astype(jnp.float32)

    beta = params['betas'][t]                            # (N,)

    loss_rot, loss_pos, loss_type = fgdpm_fused_losses(
        params, v_noisy, p_noisy, s_noisy, fg_feat, pair_feat, beta,
        mask_generate, v_0, eps_p, s_0_ignore, rot_mask, pos_mask, type_mask)
    return {'fg_rot': loss_rot, 'fg_pos': loss_pos, 'fg_type': loss_type}


# ----------------------------------- main -------------------------------------
if __name__ == "__main__":
    key = jax.random.PRNGKey(0)
    N, L = 2, 8
    fg_feat_dim, pair_feat_dim = 16, 8
    ks = jax.random.split(key, 8)

    params = init_params(ks[0], fg_feat_dim, pair_feat_dim, hidden=32)

    v_0 = 0.5 * jax.random.normal(ks[1], (N, L, 3), jnp.float32)
    p_0 = 5.0 * jax.random.normal(ks[2], (N, L, 3), jnp.float32)
    s_0 = jax.random.randint(ks[3], (N, L), 0, num_total_type)
    fg_feat = jax.random.normal(ks[4], (N, L, fg_feat_dim), jnp.float32)
    pair_feat = jax.random.normal(ks[5], (N, L, L, pair_feat_dim), jnp.float32)
    mask_generate = jnp.broadcast_to(jnp.arange(L)[None, :] < (L // 2), (N, L))
    mask_sample = jnp.broadcast_to(jnp.arange(L)[None, :] < (L - 1), (N, L))

    losses = fgdpm_forward(params, v_0, p_0, s_0, fg_feat, pair_feat,
                           mask_generate, mask_sample, ks[6])
    losses = jax.block_until_ready(losses)
    print("KERNEL_OK")
</pallas_src>

<mosaic_0001>
module attributes {stable_mosaic.version = 11 : i64} {
  func.func @_fgdpm_fused_kernel(%arg0: i32, %arg1: memref<48x128xbf16, #tpu.memory_space<vmem>>, %arg2: memref<16x128xf32, #tpu.memory_space<vmem>>, %arg3: memref<32x48xbf16, #tpu.memory_space<vmem>>, %arg4: memref<32x1xf32, #tpu.memory_space<vmem>>, %arg5: memref<32x32xbf16, #tpu.memory_space<vmem>>, %arg6: memref<32x1xf32, #tpu.memory_space<vmem>>, %arg7: memref<8x128xf32, #tpu.memory_space<vmem>>) attributes {dimension_semantics = [#tpu.dimension_semantics<parallel>], iteration_bounds = array<i64: 1>, scalar_prefetch = 0 : i64, scratch_operands = 0 : i64, tpu.core_type = #tpu.core_type<tc>, window_params = [{transform_indices = @transform_0, window_bounds = array<i64: 48, 128>}, {transform_indices = @transform_1, window_bounds = array<i64: 16, 128>}, {pipeline_mode = #tpu.pipeline_mode<synchronous>, transform_indices = @transform_2, window_bounds = array<i64: 32, 48>}, {pipeline_mode = #tpu.pipeline_mode<synchronous>, transform_indices = @transform_3, window_bounds = array<i64: 32, 1>}, {pipeline_mode = #tpu.pipeline_mode<synchronous>, transform_indices = @transform_4, window_bounds = array<i64: 32, 32>}, {pipeline_mode = #tpu.pipeline_mode<synchronous>, transform_indices = @transform_5, window_bounds = array<i64: 32, 1>}, {transform_indices = @transform_6, window_bounds = array<i64: 8, 128>}]} {
    %c0 = arith.constant 0 : index
    %c0_0 = arith.constant 0 : index
    %0 = vector.load %arg2[%c0, %c0_0] : memref<16x128xf32, #tpu.memory_space<vmem>>, vector<16x128xf32>
    %c0_1 = arith.constant 0 : index
    %c0_2 = arith.constant 0 : index
    %1 = vector.load %arg3[%c0_1, %c0_2] : memref<32x48xbf16, #tpu.memory_space<vmem>>, vector<32x48xbf16>
    %c0_3 = arith.constant 0 : index
    %c0_4 = arith.constant 0 : index
    %2 = vector.load %arg1[%c0_3, %c0_4] : memref<48x128xbf16, #tpu.memory_space<vmem>>, vector<48x128xbf16>
    %cst = arith.constant dense<0.000000e+00> : vector<32x128xf32>
    %3 = tpu.matmul %1, %2, %cst {dimension_numbers = #tpu.dot_dimension_numbers<[1], [0], [0], [1], [0, 0, 1, 1], [], []>} : vector<32x48xbf16>, vector<48x128xbf16>, vector<32x128xf32> -> vector<32x128xf32>
    %c0_5 = arith.constant 0 : index
    %c0_6 = arith.constant 0 : index
    %4 = vector.load %arg4[%c0_5, %c0_6] : memref<32x1xf32, #tpu.memory_space<vmem>>, vector<32x1xf32>
    %5 = vector.broadcast %4 : vector<32x1xf32> to vector<32x128xf32>
    %6 = arith.addf %3, %5 : vector<32x128xf32>
    %7 = math.tanh %6 : vector<32x128xf32>
    %c0_7 = arith.constant 0 : index
    %c0_8 = arith.constant 0 : index
    %8 = vector.load %arg5[%c0_7, %c0_8] : memref<32x32xbf16, #tpu.memory_space<vmem>>, vector<32x32xbf16>
    %9 = arith.truncf %7 : vector<32x128xf32> to vector<32x128xbf16>
    %cst_9 = arith.constant dense<0.000000e+00> : vector<32x128xf32>
    %10 = tpu.matmul %8, %9, %cst_9 {dimension_numbers = #tpu.dot_dimension_numbers<[1], [0], [0], [1], [0, 0, 1, 1], [], []>} : vector<32x32xbf16>, vector<32x128xbf16>, vector<32x128xf32> -> vector<32x128xf32>
    %c0_10 = arith.constant 0 : index
    %c0_11 = arith.constant 0 : index
    %11 = vector.load %arg6[%c0_10, %c0_11] : memref<32x1xf32, #tpu.memory_space<vmem>>, vector<32x1xf32>
    %12 = vector.broadcast %11 : vector<32x1xf32> to vector<32x128xf32>
    %13 = arith.addf %10, %12 : vector<32x128xf32>
    %14 = vector.extract_strided_slice %0 {offsets = [13, 0], sizes = [1, 128], strides = [1, 1]} : vector<16x128xf32> to vector<1x128xf32>
    %cst_12 = arith.constant 5.000000e-01 : f32
    %15 = vector.broadcast %cst_12 : f32 to vector<1x128xf32>
    %16 = arith.cmpf ogt, %14, %15 : vector<1x128xf32>
    %17 = vector.extract_strided_slice %13 {offsets = [16, 0], sizes = [3, 128], strides = [1, 1]} : vector<32x128xf32> to vector<3x128xf32>
    %18 = vector.extract_strided_slice %0 {offsets = [0, 0], sizes = [3, 128], strides = [1, 1]} : vector<16x128xf32> to vector<3x128xf32>
    %19 = vector.shape_cast %16 : vector<1x128xi1> to vector<1x128xi1>
    %20 = vector.broadcast %19 : vector<1x128xi1> to vector<3x128xi1>
    %21 = arith.select %20, %17, %18 : vector<3x128xi1>, vector<3x128xf32>
    %22 = vector.extract_strided_slice %13 {offsets = [19, 0], sizes = [3, 128], strides = [1, 1]} : vector<32x128xf32> to vector<3x128xf32>
    %cst_13 = arith.constant 0.000000e+00 : f32
    %23 = vector.shape_cast %16 : vector<1x128xi1> to vector<1x128xi1>
    %24 = vector.broadcast %23 : vector<1x128xi1> to vector<3x128xi1>
    %25 = vector.broadcast %cst_13 : f32 to vector<3x128xf32>
    %26 = arith.select %24, %22, %25 : vector<3x128xi1>, vector<3x128xf32>
    %27 = vector.extract_strided_slice %0 {offsets = [3, 0], sizes = [3, 128], strides = [1, 1]} : vector<16x128xf32> to vector<3x128xf32>
    %28 = arith.mulf %21, %21 : vector<3x128xf32>
    %cst_14 = arith.constant dense<0.000000e+00> : vector<128xf32>
    %29 = vector.multi_reduction <add>, %28, %cst_14 [0] : vector<3x128xf32> to vector<128xf32>
    %30 = vector.shape_cast %29 : vector<128xf32> to vector<1x128xf32>
    %cst_15 = arith.constant 1.000000e-16 : f32
    %31 = vector.broadcast %cst_15 : f32 to vector<1x128xf32>
    %32 = arith.maximumf %30, %31 : vector<1x128xf32>
    %33 = math.rsqrt %32 : vector<1x128xf32>
    %34 = arith.mulf %30, %33 : vector<1x128xf32>
    %35 = math.cos %34 : vector<1x128xf32>
    %36 = math.sin %34 : vector<1x128xf32>
    %cst_16 = arith.constant 1.000000e+00 : f32
    %37 = vector.broadcast %cst_16 : f32 to vector<1x128xf32>
    %38 = arith.subf %37, %35 : vector<1x128xf32>
    %39 = arith.mulf %27, %27 : vector<3x128xf32>
    %cst_17 = arith.constant dense<0.000000e+00> : vector<128xf32>
    %40 = vector.multi_reduction <add>, %39, %cst_17 [0] : vector<3x128xf32> to vector<128xf32>
    %41 = vector.shape_cast %40 : vector<128xf32> to vector<1x128xf32>
    %cst_18 = arith.constant 1.000000e-16 : f32
    %42 = vector.broadcast %cst_18 : f32 to vector<1x128xf32>
    %43 = arith.maximumf %41, %42 : vector<1x128xf32>
    %44 = math.rsqrt %43 : vector<1x128xf32>
    %45 = arith.mulf %41, %44 : vector<1x128xf32>
    %46 = math.cos %45 : vector<1x128xf32>
    %47 = math.sin %45 : vector<1x128xf32>
    %cst_19 = arith.constant 1.000000e+00 : f32
    %48 = vector.broadcast %cst_19 : f32 to vector<1x128xf32>
    %49 = arith.subf %48, %46 : vector<1x128xf32>
    %50 = arith.mulf %21, %27 : vector<3x128xf32>
    %cst_20 = arith.constant dense<0.000000e+00> : vector<128xf32>
    %51 = vector.multi_reduction <add>, %50, %cst_20 [0] : vector<3x128xf32> to vector<128xf32>
    %52 = vector.shape_cast %51 : vector<128xf32> to vector<1x128xf32>
    %53 = arith.mulf %33, %44 : vector<1x128xf32>
    %54 = arith.mulf %52, %53 : vector<1x128xf32>
    %cst_21 = arith.constant 3.000000e+00 : f32
    %55 = vector.broadcast %cst_21 : f32 to vector<1x128xf32>
    %56 = arith.mulf %55, %35 : vector<1x128xf32>
    %57 = arith.mulf %56, %46 : vector<1x128xf32>
    %58 = arith.mulf %35, %49 : vector<1x128xf32>
    %59 = arith.addf %57, %58 : vector<1x128xf32>
    %60 = arith.mulf %38, %46 : vector<1x128xf32>
    %61 = arith.addf %59, %60 : vector<1x128xf32>
    %cst_22 = arith.constant 2.000000e+00 : f32
    %62 = vector.broadcast %cst_22 : f32 to vector<1x128xf32>
    %63 = arith.mulf %62, %36 : vector<1x128xf32>
    %64 = arith.mulf %63, %47 : vector<1x128xf32>
    %65 = arith.mulf %64, %54 : vector<1x128xf32>
    %66 = arith.addf %61, %65 : vector<1x128xf32>
    %67 = arith.mulf %38, %49 : vector<1x128xf32>
    %68 = arith.mulf %67, %54 : vector<1x128xf32>
    %69 = arith.mulf %68, %54 : vector<1x128xf32>
    %70 = arith.addf %66, %69 : vector<1x128xf32>
    %cst_23 = arith.constant 3.000000e+00 : f32
    %71 = vector.broadcast %cst_23 : f32 to vector<1x128xf32>
    %72 = arith.subf %71, %70 : vector<1x128xf32>
    %73 = vector.extract_strided_slice %0 {offsets = [6, 0], sizes = [3, 128], strides = [1, 1]} : vector<16x128xf32> to vector<3x128xf32>
    %74 = arith.subf %26, %73 : vector<3x128xf32>
    %75 = arith.mulf %74, %74 : vector<3x128xf32>
    %cst_24 = arith.constant dense<0.000000e+00> : vector<128xf32>
    %76 = vector.multi_reduction <add>, %75, %cst_24 [0] : vector<3x128xf32> to vector<128xf32>
    %77 = vector.shape_cast %76 : vector<128xf32> to vector<1x128xf32>
    %78 = vector.extract_strided_slice %13 {offsets = [0, 0], sizes = [16, 128], strides = [1, 1]} : vector<32x128xf32> to vector<16x128xf32>
    %cst_25 = arith.constant dense<0xFF800000> : vector<128xf32>
    %79 = vector.multi_reduction <maximumf>, %78, %cst_25 [0] : vector<16x128xf32> to vector<128xf32>
    %80 = vector.shape_cast %79 : vector<128xf32> to vector<1x128xf32>
    %81 = vector.broadcast %80 : vector<1x128xf32> to vector<16x128xf32>
    %82 = arith.subf %78, %81 : vector<16x128xf32>
    %83 = math.exp %82 : vector<16x128xf32>
    %cst_26 = arith.constant dense<0.000000e+00> : vector<128xf32>
    %84 = vector.multi_reduction <add>, %83, %cst_26 [0] : vector<16x128xf32> to vector<128xf32>
    %85 = vector.shape_cast %84 : vector<128xf32> to vector<1x128xf32>
    %86 = math.log %85 : vector<1x128xf32>
    %87 = arith.addf %80, %86 : vector<1x128xf32>
    %88 = tpu.iota {dimensions = array<i32: 0>} : vector<16x128xi32>
    %89 = arith.sitofp %88 : vector<16x128xi32> to vector<16x128xf32>
    %90 = vector.extract_strided_slice %0 {offsets = [9, 0], sizes = [1, 128], strides = [1, 1]} : vector<16x128xf32> to vector<1x128xf32>
    %91 = vector.broadcast %90 : vector<1x128xf32> to vector<16x128xf32>
    %92 = arith.cmpf oeq, %89, %91 : vector<16x128xf32>
    %93 = arith.extui %92 : vector<16x128xi1> to vector<16x128xi32>
    %94 = arith.sitofp %93 : vector<16x128xi32> to vector<16x128xf32>
    %95 = arith.mulf %78, %94 : vector<16x128xf32>
    %cst_27 = arith.constant dense<0.000000e+00> : vector<128xf32>
    %96 = vector.multi_reduction <add>, %95, %cst_27 [0] : vector<16x128xf32> to vector<128xf32>
    %97 = vector.shape_cast %96 : vector<128xf32> to vector<1x128xf32>
    %98 = arith.subf %87, %97 : vector<1x128xf32>
    %99 = vector.extract_strided_slice %0 {offsets = [10, 0], sizes = [1, 128], strides = [1, 1]} : vector<16x128xf32> to vector<1x128xf32>
    %100 = vector.extract_strided_slice %0 {offsets = [11, 0], sizes = [1, 128], strides = [1, 1]} : vector<16x128xf32> to vector<1x128xf32>
    %101 = vector.extract_strided_slice %0 {offsets = [12, 0], sizes = [1, 128], strides = [1, 1]} : vector<16x128xf32> to vector<1x128xf32>
    %102 = arith.mulf %72, %99 : vector<1x128xf32>
    %103 = vector.shape_cast %102 : vector<1x128xf32> to vector<1x1x128xf32>
    %cst_28 = arith.constant dense<0.000000e+00> : vector<1xf32>
    %104 = vector.multi_reduction <add>, %103, %cst_28 [1, 2] : vector<1x1x128xf32> to vector<1xf32>
    %105 = vector.shape_cast %104 : vector<1xf32> to vector<1x1x1xf32>
    %106 = vector.extract %105[0, 0, 0] : f32 from vector<1x1x1xf32>
    %107 = vector.shape_cast %99 : vector<1x128xf32> to vector<1x1x128xf32>
    %cst_29 = arith.constant dense<0.000000e+00> : vector<1xf32>
    %108 = vector.multi_reduction <add>, %107, %cst_29 [1, 2] : vector<1x1x128xf32> to vector<1xf32>
    %109 = vector.shape_cast %108 : vector<1xf32> to vector<1x1x1xf32>
    %110 = vector.extract %109[0, 0, 0] : f32 from vector<1x1x1xf32>
    %111 = arith.mulf %77, %100 : vector<1x128xf32>
    %112 = vector.shape_cast %111 : vector<1x128xf32> to vector<1x1x128xf32>
    %cst_30 = arith.constant dense<0.000000e+00> : vector<1xf32>
    %113 = vector.multi_reduction <add>, %112, %cst_30 [1, 2] : vector<1x1x128xf32> to vector<1xf32>
    %114 = vector.shape_cast %113 : vector<1xf32> to vector<1x1x1xf32>
    %115 = vector.extract %114[0, 0, 0] : f32 from vector<1x1x1xf32>
    %116 = vector.shape_cast %100 : vector<1x128xf32> to vector<1x1x128xf32>
    %cst_31 = arith.constant dense<0.000000e+00> : vector<1xf32>
    %117 = vector.multi_reduction <add>, %116, %cst_31 [1, 2] : vector<1x1x128xf32> to vector<1xf32>
    %118 = vector.shape_cast %117 : vector<1xf32> to vector<1x1x1xf32>
    %119 = vector.extract %118[0, 0, 0] : f32 from vector<1x1x1xf32>
    %120 = arith.mulf %98, %101 : vector<1x128xf32>
    %121 = vector.shape_cast %120 : vector<1x128xf32> to vector<1x1x128xf32>
    %cst_32 = arith.constant dense<0.000000e+00> : vector<1xf32>
    %122 = vector.multi_reduction <add>, %121, %cst_32 [1, 2] : vector<1x1x128xf32> to vector<1xf32>
    %123 = vector.shape_cast %122 : vector<1xf32> to vector<1x1x1xf32>
    %124 = vector.extract %123[0, 0, 0] : f32 from vector<1x1x1xf32>
    %125 = vector.shape_cast %101 : vector<1x128xf32> to vector<1x1x128xf32>
    %cst_33 = arith.constant dense<0.000000e+00> : vector<1xf32>
    %126 = vector.multi_reduction <add>, %125, %cst_33 [1, 2] : vector<1x1x128xf32> to vector<1xf32>
    %127 = vector.shape_cast %126 : vector<1xf32> to vector<1x1x1xf32>
    %128 = vector.extract %127[0, 0, 0] : f32 from vector<1x1x1xf32>
    %129 = vector.broadcast %106 : f32 to vector<1x128xf32>
    %130 = vector.broadcast %110 : f32 to vector<1x128xf32>
    %131 = vector.broadcast %115 : f32 to vector<1x128xf32>
    %132 = vector.broadcast %119 : f32 to vector<1x128xf32>
    %133 = vector.broadcast %124 : f32 to vector<1x128xf32>
    %134 = vector.broadcast %128 : f32 to vector<1x128xf32>
    %cst_34 = arith.constant 0.000000e+00 : f32
    %135 = vector.broadcast %cst_34 : f32 to vector<1x128xf32>
    %cst_35 = arith.constant 0.000000e+00 : f32
    %136 = vector.broadcast %cst_35 : f32 to vector<1x128xf32>
    %137 = tpu.concatenate %129, %130, %131, %132, %133, %134, %135, %136 in 0 : vector<1x128xf32>, vector<1x128xf32>, vector<1x128xf32>, vector<1x128xf32>, vector<1x128xf32>, vector<1x128xf32>, vector<1x128xf32>, vector<1x128xf32> -> vector<8x128xf32>
    %c0_36 = arith.constant 0 : index
    %c0_37 = arith.constant 0 : index
    %138 = vector.load %arg7[%c0_36, %c0_37] : memref<8x128xf32, #tpu.memory_space<vmem>>, vector<8x128xf32>
    tpu.vector_store %arg7[%c0_36, %c0_37], %137 {strides = array<i32>} : memref<8x128xf32, #tpu.memory_space<vmem>>, vector<8x128xf32>,
    return
  }
  func.func @transform_0(%arg0: i32) -> (i32, i32) {
    %c0_i32 = arith.constant 0 : i32
    %c0_i32_0 = arith.constant 0 : i32
    return %c0_i32, %arg0 : i32, i32
  }
  func.func @transform_1(%arg0: i32) -> (i32, i32) {
    %c0_i32 = arith.constant 0 : i32
    %c0_i32_0 = arith.constant 0 : i32
    return %c0_i32, %arg0 : i32, i32
  }
  func.func @transform_2(%arg0: i32) -> (i32, i32) {
    %c0_i32 = arith.constant 0 : i32
    %c0_i32_0 = arith.constant 0 : i32
    %c0_i32_1 = arith.constant 0 : i32
    return %c0_i32, %c0_i32_0 : i32, i32
  }
  func.func @transform_3(%arg0: i32) -> (i32, i32) {
    %c0_i32 = arith.constant 0 : i32
    %c0_i32_0 = arith.constant 0 : i32
    %c0_i32_1 = arith.constant 0 : i32
    return %c0_i32, %c0_i32_0 : i32, i32
  }
  func.func @transform_4(%arg0: i32) -> (i32, i32) {
    %c0_i32 = arith.constant 0 : i32
    %c0_i32_0 = arith.constant 0 : i32
    %c0_i32_1 = arith.constant 0 : i32
    return %c0_i32, %c0_i32_0 : i32, i32
  }
  func.func @transform_5(%arg0: i32) -> (i32, i32) {
    %c0_i32 = arith.constant 0 : i32
    %c0_i32_0 = arith.constant 0 : i32
    %c0_i32_1 = arith.constant 0 : i32
    return %c0_i32, %c0_i32_0 : i32, i32
  }
  func.func @transform_6(%arg0: i32) -> (i32, i32) {
    %c0_i32 = arith.constant 0 : i32
    %c0_i32_0 = arith.constant 0 : i32
    return %arg0, %c0_i32 : i32, i32
  }
}

</mosaic_0001>

<llo_original>
// kernel: tpu_custom_call.1
$region0: #{tpu_custom_call.1}
  #allocation0 [shape = 'u32[]', space=smem, size = 0x4, offset = 0x4, fixed_abs, tag = 'smem constant byte address 0x4 - core index']
  #allocation1 [shape = 'u32[144,128]{1,0:T(1,128)}', space=vmem, size = 0x12000, scoped, tag = 'internal scratch']
  %s0 = inlined_call_operand.vmem [shape: bf16[48,128], index: 0, kind: input, shape index: {}]
  %s1 = inlined_call_operand.vmem [shape: f32[16,128], index: 1, kind: input, shape index: {}]
  %s2 = inlined_call_operand.vmem [shape: bf16[32,48], index: 2, kind: input, shape index: {}]
  %s3 = inlined_call_operand.vmem [shape: f32[32,1], index: 3, kind: input, shape index: {}]
  %s4 = inlined_call_operand.vmem [shape: bf16[32,32], index: 4, kind: input, shape index: {}]
  %s5 = inlined_call_operand.vmem [shape: f32[32,1], index: 5, kind: input, shape index: {}]
  %s6 = inlined_call_operand.hbm [shape: f32[8,128], index: 6, kind: output, shape index: {}]
  %s7 = sld [smem:[#allocation0]]
  $region34: #{tpu_custom_call.1} parent=0
    _
  %s9 = ssub.s32 1, %s7
  %s10 = scalar_select 0, %s9, %s7
  $region1: #{tpu_custom_call.1} parent=0
    #allocation2 [shape = 'u8[4096]{0}', space=vmem, size = 0x1000, scoped, tag = 'output window, operand 0, single buffered']
    #allocation3 [shape = 's32[1]{0}', space=sflag, size = 0x4, scoped, tag = 'scoped memory for tpu_custom_call.1']
    %11 = vsyncpa [#allocation3], 0
    // Predicated region
    $region2: #{tpu_custom_call.1} parent=1 // pred_check
      _
    $region3: #{tpu_custom_call.1} parent=1 // pred_check_branch
      %13 = sbr.rel (0) target = $region5
    $region4: #{tpu_custom_call.1} parent=1 // pred_region
      _
    $region5: #{tpu_custom_call.1} parent=1 // pred_fallthru
      _
    // Predicated region
    $region6: #{tpu_custom_call.1} parent=1 // pred_check
      _
    $region7: #{tpu_custom_call.1} parent=1 // pred_check_branch
      %15 = sbr.rel (0) target = $region9
    $region8: #{tpu_custom_call.1} parent=1 // pred_region
      _
    $region9: #{tpu_custom_call.1} parent=1 // pred_fallthru
      _
    // Predicated region
    $region10: #{tpu_custom_call.1} parent=1 // pred_check
      _
    $region11: #{tpu_custom_call.1} parent=1 // pred_check_branch
      %17 = sbr.rel (0) target = $region13
    $region12: #{tpu_custom_call.1} parent=1 // pred_region
      _
    $region13: #{tpu_custom_call.1} parent=1 // pred_fallthru
      _
    // Predicated region
    $region14: #{tpu_custom_call.1} parent=1 // pred_check
      _
    $region15: #{tpu_custom_call.1} parent=1 // pred_check_branch
      %19 = sbr.rel (0) target = $region17
    $region16: #{tpu_custom_call.1} parent=1 // pred_region
      _
    $region17: #{tpu_custom_call.1} parent=1 // pred_fallthru
      _
    // Predicated region
    $region18: #{tpu_custom_call.1} parent=1 // pred_check
      _
    $region19: #{tpu_custom_call.1} parent=1 // pred_check_branch
      %21 = sbr.rel (0) target = $region21
    $region20: #{tpu_custom_call.1} parent=1 // pred_region
      _
    $region21: #{tpu_custom_call.1} parent=1 // pred_fallthru
      _
    // Predicated region
    $region22: #{tpu_custom_call.1} parent=1 // pred_check
      _
    $region23: #{tpu_custom_call.1} parent=1 // pred_check_branch
      %23 = sbr.rel (0) target = $region25
    $region24: #{tpu_custom_call.1} parent=1 // pred_region
      _
    $region25: #{tpu_custom_call.1} parent=1 // pred_fallthru
      _
    %v25 = vld [vmem:[%s1] sm:$0xff]
    %v26 = vld [vmem:[%s1 + $0x8] sm:$0xff]
    %v27 = vld [vmem:[%s2] sm:$0xf]
    %v28 = vld [vmem:[%s2 + $0x4] sm:$0xf]
    %v29 = vld [vmem:[%s2 + $0x8] sm:$0xf]
    %v30 = vld [vmem:[%s2 + $0xc] sm:$0xf]
    %v31 = vld [vmem:[%s0] sm:$0xf]
    %v32 = vld [vmem:[%s0 + $0x4] sm:$0xf]
    %v33 = vld [vmem:[%s0 + $0x8] sm:$0xf]
    %v34 = vld [vmem:[%s0 + $0xc] sm:$0xf]
    %v35 = vld [vmem:[%s0 + $0x10] sm:$0xf]
    %v36 = vld [vmem:[%s0 + $0x14] sm:$0xf]
    %v37 = vld [vmem:[%s3] sm:$0xff]
    %v38 = vld [vmem:[%s3 + $0x8] sm:$0xff]
    %v39 = vld [vmem:[%s3 + $0x10] sm:$0xff]
    %v40 = vld [vmem:[%s3 + $0x18] sm:$0xff]
    %42 = vset.pattern.permute.xlu0 0
    %43 = vperm.xlu0 %42, %v37
    %v44 = vpop.permute.xlu0 %43
    %47 = vset.pattern.permute.xlu0 0
    %48 = vperm.xlu0 %47, %v38
    %v49 = vpop.permute.xlu0 %48
    %52 = vset.pattern.permute.xlu0 0
    %53 = vperm.xlu0 %52, %v39
    %v54 = vpop.permute.xlu0 %53
    %57 = vset.pattern.permute.xlu0 0
    %58 = vperm.xlu0 %57, %v40
    %v59 = vpop.permute.xlu0 %58
    %v65 = vunpack.c.l.b16 %v27
    %v66 = vunpack.c.l.b16 %v28
    %v67 = vunpack.c.l.b16 %v29
    %v68 = vunpack.c.l.b16 %v30
    %v69 = vpack.c.b16 %v66, %v65
    %v70 = vpack.c.b16 %v68, %v67
    %v77 = vunpack.c.l.b16 %v31
    %v78 = vunpack.c.l.b16 %v32
    %v79 = vunpack.c.l.b16 %v33
    %v80 = vunpack.c.l.b16 %v34
    %v81 = vunpack.c.l.b16 %v35
    %v82 = vunpack.c.l.b16 %v36
    %v83 = vpack.c.b16 %v78, %v77
    %v84 = vpack.c.b16 %v80, %v79
    %v85 = vpack.c.b16 %v82, %v81
    %vm89 = vcmask 392192
    %v91 = vsel %vm89, %v69, 0
    %v94 = vsel %vm89, %v70, 0
    %96 = vmatprep.subr.bf16.mxu0 0
    %97 = vmatpush1.bf16.msra.mxu0 0
    %98 = vmatprep.subr.bf16.mxu0 0
    %99 = vmatpush1.bf16.msra.mxu0 0
    %100 = vmatprep.subr.bf16.mxu0 0
    %101 = vmatpush1.bf16.msra.mxu0 0
    %102 = vmatprep.subr.bf16.mxu0 0
    %103 = vmatpush1.bf16.msra.mxu0 0
    %104 = vmatprep.subr.bf16.mxu0 0
    %105 = vmatpush1.bf16.msra.mxu0 0
    %106 = vmatprep.subr.bf16.mxu0 0
    %107 = vmatpush1.bf16.msra.mxu0 %v85
    %108 = vmatprep.subr.bf16.mxu0 0
    %109 = vmatpush1.bf16.msra.mxu0 %v84
    %110 = vmatprep.subr.bf16.mxu0 0
    %111 = vmatpush1.bf16.msra.mxu0 %v83
    %112 = vmatprep.subr.bf16.mxu0 0
    %113 = vmatpush2.bf16.msra.mxu0 0
    %114 = vmatprep.subr.bf16.mxu0 0
    %115 = vmatpush2.bf16.msra.mxu0 0
    %116 = vmatprep.subr.bf16.mxu0 0
    %117 = vmatpush2.bf16.msra.mxu0 0
    %118 = vmatprep.subr.bf16.mxu0 0
    %119 = vmatpush2.bf16.msra.mxu0 0
    %120 = vmatprep.subr.bf16.mxu0 0
    %121 = vmatpush2.bf16.msra.mxu0 0
    %122 = vmatprep.subr.bf16.mxu0 0
    %123 = vmatpush2.bf16.msra.mxu0 0
    %124 = vmatprep.subr.bf16.mxu0 0
    %125 = vmatpush2.bf16.msra.mxu0 0
    %126 = vmatprep.subr.bf16.mxu0 0
    %127 = vmatpush2.bf16.msra.mxu0 0
    %128 = vmatprep.mubr.bf16.mxu0 0
    %129 = vmatmul.mubr.bf16.gmra.mxu0 %v91
    %v130 = vpop.f32.mrf.mxu0
    %v131 = vadd.f32 %v44, %v130
    %v132 = vpop.f32.mrf.mxu0
    %v133 = vpop.f32.mrf.mxu0
    %v134 = vadd.f32 %v49, %v133
    %v135 = vpop.f32.mrf.mxu0
    %136 = vmatprep.mubr.bf16.mxu0 0
    %137 = vmatmul.mubr.bf16.gmra.mxu0 %v94
    %v138 = vpop.f32.mrf.mxu0
    %v139 = vadd.f32 %v54, %v138
    %v140 = vpop.f32.mrf.mxu0
    %v141 = vpop.f32.mrf.mxu0
    %v142 = vadd.f32 %v59, %v141
    %v143 = vpop.f32.mrf.mxu0
    %144 = vdwg.mxu0
    %v145 = vtanh.pop %v131
    %v146 = vtanh.pop %v134
    %v147 = vtanh.pop %v139
    %v148 = vtanh.pop %v142
    %v149 = vld [vmem:[%s4] sm:$0xf]
    %v150 = vld [vmem:[%s4 + $0x4] sm:$0xf]
    %v151 = vld [vmem:[%s4 + $0x8] sm:$0xf]
    %v152 = vld [vmem:[%s4 + $0xc] sm:$0xf]
    %v153 = vpack.c.bf16 %v146, %v145
    %v154 = vpack.c.bf16 %v148, %v147
    %v155 = vld [vmem:[%s5] sm:$0xff]
    %v156 = vld [vmem:[%s5 + $0x8] sm:$0xff]
    %v157 = vld [vmem:[%s5 + $0x10] sm:$0xff]
    %v158 = vld [vmem:[%s5 + $0x18] sm:$0xff]
    %160 = vset.pattern.permute.xlu0 0
    %161 = vperm.xlu0 %160, %v155
    %v162 = vpop.permute.xlu0 %161
    %165 = vset.pattern.permute.xlu0 0
    %166 = vperm.xlu0 %165, %v156
    %v167 = vpop.permute.xlu0 %166
    %170 = vset.pattern.permute.xlu0 0
    %171 = vperm.xlu0 %170, %v157
    %v172 = vpop.permute.xlu0 %171
    %175 = vset.pattern.permute.xlu0 0
    %176 = vperm.xlu0 %175, %v158
    %v177 = vpop.permute.xlu0 %176
    %v182 = vunpack.c.l.b16 %v149
    %v183 = vunpack.c.l.b16 %v150
    %v184 = vunpack.c.l.b16 %v151
    %v185 = vunpack.c.l.b16 %v152
    %v186 = vpack.c.b16 %v183, %v182
    %v187 = vpack.c.b16 %v185, %v184
    %vm188 = vcmask 261120
    %v190 = vsel %vm188, %v186, 0
    %v193 = vsel %vm188, %v187, 0
    %195 = vmatprep.subr.bf16.mxu0 0
    %196 = vmatpush1.bf16.msra.mxu0 0
    %197 = vmatprep.subr.bf16.mxu0 0
    %198 = vmatpush1.bf16.msra.mxu0 0
    %199 = vmatprep.subr.bf16.mxu0 0
    %200 = vmatpush1.bf16.msra.mxu0 0
    %201 = vmatprep.subr.bf16.mxu0 0
    %202 = vmatpush1.bf16.msra.mxu0 0
    %203 = vmatprep.subr.bf16.mxu0 0
    %204 = vmatpush1.bf16.msra.mxu0 0
    %205 = vmatprep.subr.bf16.mxu0 0
    %206 = vmatpush1.bf16.msra.mxu0 0
    %207 = vmatprep.subr.bf16.mxu0 0
    %208 = vmatpush1.bf16.msra.mxu0 %v154
    %209 = vmatprep.subr.bf16.mxu0 0
    %210 = vmatpush1.bf16.msra.mxu0 %v153
    %211 = vmatprep.subr.bf16.mxu0 0
    %212 = vmatpush2.bf16.msra.mxu0 0
    %213 = vmatprep.subr.bf16.mxu0 0
    %214 = vmatpush2.bf16.msra.mxu0 0
    %215 = vmatprep.subr.bf16.mxu0 0
    %216 = vmatpush2.bf16.msra.mxu0 0
    %217 = vmatprep.subr.bf16.mxu0 0
    %218 = vmatpush2.bf16.msra.mxu0 0
    %219 = vmatprep.subr.bf16.mxu0 0
    %220 = vmatpush2.bf16.msra.mxu0 0
    %221 = vmatprep.subr.bf16.mxu0 0
    %222 = vmatpush2.bf16.msra.mxu0 0
    %223 = vmatprep.subr.bf16.mxu0 0
    %224 = vmatpush2.bf16.msra.mxu0 0
    %225 = vmatprep.subr.bf16.mxu0 0
    %226 = vmatpush2.bf16.msra.mxu0 0
    %227 = vmatprep.mubr.bf16.mxu0 0
    %228 = vmatmul.mubr.bf16.gmra.mxu0 %v190
    %v229 = vpop.f32.mrf.mxu0
    %v230 = vadd.f32 %v162, %v229
    %v231 = vpop.f32.mrf.mxu0
    %v232 = vpop.f32.mrf.mxu0
    %v233 = vadd.f32 %v167, %v232
    %v234 = vpop.f32.mrf.mxu0
    %235 = vmatprep.mubr.bf16.mxu0 0
    %236 = vmatmul.mubr.bf16.gmra.mxu0 %v193
    %v237 = vpop.f32.mrf.mxu0
    %v238 = vadd.f32 %v172, %v237
    %v239 = vpop.f32.mrf.mxu0
    %v240 = vpop.f32.mrf.mxu0
    %v241 = vpop.f32.mrf.mxu0
    %242 = vdwg.mxu0
    %vm243 = vcmp.gt.f32.partialorder %v26, 0.5
    %v244 = vsel %vm243, 1, 0
    %v245 = vlaneseq
    %v246 = vshrl.u32 %v245, 7
    %v247 = vsub.s32 5, %v246
    %v248 = vrot.slane %v244, %v247
    %vm249 = vcmp.eq.s32.totalorder %v248, 1
    %v250 = vsel %vm249, %v238, %v25
    %v251 = vsel %vm249, %v238, 0.0
    %v252 = vmul.f32 %v250, %v250
    %vm253 = vcmask 1042432
    %v254 = vsel %vm253, %v252, 0.0
    %v255 = vrot.slane %v254, 4
    %v256 = vadd.f32 %v254, %v255
    %v257 = vrot.slane %v256, 2
    %v258 = vadd.f32 %v256, %v257
    %v259 = vrot.slane %v258, 1
    %v260 = vadd.f32 %v258, %v259
    %v261 = vmax.f32 %v260, 1e-16
    %v262 = vrsqrt.pop %v261
    %v263 = vmul.f32 %v260, %v262
    %v264 = vand.u32 2147483647, %v263
    %vm265 = vcmp.le.f32.partialorder %v264, 0.7853982
    %vm266 = vcmp.lt.s32.totalorder %v263, 0
    %v267 = vand.u32 %v263, 2139095040
    %v268 = vshrl.u32 %v267, 23
    %v269 = vsub.s32 %v268, 127
    %v270 = vand.u32 2147483647, %v263
    %v271 = vand.u32 %v270, 8388607
    %v272 = vor.u32 %v271, 8388608
    %v273 = vsub.s32 0, %v272
    %v274 = vadd.s32 %v269, 1
    %vm275 = vcmp.gt.s32.totalorder %v274, 0
    %v276 = vsel %vm275, %v274, 0
    %v277 = vshrl.u32 %v276, 5
    %v278 = vand.u32 %v276, 31
    %v279 = vsub.s32 32, %v278
    %v280 = vshrl.u32 683565275, %v279
    %v281 = vshll.u32 683565275, %v278
    %v282 = vshrl.u32 2475754826, %v279
    %v283 = vor.u32 %v281, %v282
    %v284 = vshll.u32 2475754826, %v278
    %v285 = vshrl.u32 2131351028, %v279
    %v286 = vor.u32 %v284, %v285
    %v287 = vshll.u32 2131351028, %v278
    %v288 = vshrl.u32 2102212464, %v279
    %v289 = vor.u32 %v287, %v288
    %v290 = vshll.u32 2102212464, %v278
    %v291 = vshrl.u32 920167782, %v279
    %v292 = vor.u32 %v290, %v291
    %v293 = vshll.u32 920167782, %v278
    %v294 = vshrl.u32 1326507024, %v279
    %v295 = vor.u32 %v293, %v294
    %vm296 = vcmp.lt.s32.totalorder %v277, 1
    %vm297 = vcmp.lt.s32.totalorder %v277, 2
    %vm298 = vcmp.lt.s32.totalorder %v277, 3
    %vm299 = vcmp.lt.s32.totalorder %v277, 4
    %v300 = vsel %vm296, %v280, %v283
    %v301 = vsel %vm299, %v289, 2102212464
    %v302 = vsel %vm298, %v286, %v301
    %v303 = vsel %vm297, %v300, %v302
    %v304 = vsel %vm296, %v283, %v286
    %v305 = vsel %vm299, %v292, 920167782
    %v306 = vsel %vm298, %v289, %v305
    %v307 = vsel %vm297, %v304, %v306
    %v308 = vsel %vm296, %v286, %v289
    %v309 = vsel %vm299, %v295, 1326507024
    %v310 = vsel %vm298, %v292, %v309
    %v311 = vsel %vm297, %v308, %v310
    %v312 = vshll.u32 %v272, 8
    %v313 = vmul.u32.u64.compose %v312, %v311
    %v314 = vextract.low.u32 %v313
    %v315 = vextract.high.u32 %v313
    %v316 = vmul.u32.u64.compose %v312, %v307
    %v317 = vextract.low.u32 %v316
    %v318 = vextract.high.u32 %v316
    %v319 = vmul.u32 %v312, %v303
    %v320 = vadd.s32 %v315, %v317
    %vm321 = vc.u32 %v315, %v317
    %v322 = vadd.s32 %v318, 1
    %v323 = vsel %vm321, %v322, %v318
    %v324 = vadd.s32 %v319, %v323
    %v325 = vadd.s32 %v324, 536870912
    %v326 = vshrl.u32 %v325, 30
    %v327 = vshll.u32 %v326, 30
    %v328 = vsub.s32 %v324, %v327
    %vm329 = vcmp.lt.s32.totalorder %v328, 0
    %v330 = vsub.s32 0, %v328
    %v331 = vsel %vm329, %v330, %v328
    %v332 = vclz %v331
    %v333 = vsub.s32 %v332, 2
    %vm334 = vcmp.gt.s32.totalorder 0, %v333
    %v335 = vsel %vm334, 0, %v333
    %v336 = vsub.s32 32, %v335
    %v337 = vshll.u32 %v328, %v335
    %v338 = vshrl.u32 %v320, %v336
    %v339 = vor.u32 %v337, %v338
    %v340 = vsub.s32 4294967266, %v335
    %v341 = vadd.s32 %v340, 127
    %v342 = vshll.u32 %v341, 23
    %v343 = vor.u32 4788187, %v342
    %v344 = vand.u32 2147483647, %v343
    %v346 = vcvt.s32.f32 %v339
    %v347 = vmul.f32 %v346, %v344
    %v348 = vxor.u32 %v347, 2147483648
    %v349 = vsel %vm266, %v348, %v347
    %v350 = vsub.s32 4, %v326
    %v351 = vsel %vm266, %v350, %v326
    %v352 = vsel %vm265, %v263, %v349
    %v353 = vsel %vm265, 0, %v351
    %v354 = vcosq.f32.pop %v352
    %v355 = vsinq.f32.pop %v352
    %vm356 = vweird.f32 %v263
    %v357 = vand.u32 %v353, 3
    %vm358 = vcmp.lt.s32.totalorder %v357, 2
    %vm359 = vcmp.eq.s32.totalorder %v357, 0
    %v360 = vxor.u32 %v355, 2147483648
    %v361 = vsel %vm359, %v354, %v360
    %vm362 = vcmp.eq.s32.totalorder %v357, 2
    %v363 = vxor.u32 %v354, 2147483648
    %v364 = vsel %vm362, %v363, %v355
    %v365 = vsel %vm358, %v361, %v364
    %v366 = vsel %vm356, nan, %v365
    %v367 = vand.u32 2147483647, %v263
    %vm368 = vcmp.le.f32.partialorder %v367, 0.7853982
    %vm369 = vcmp.lt.s32.totalorder %v263, 0
    %v370 = vand.u32 %v263, 2139095040
    %v371 = vshrl.u32 %v370, 23
    %v372 = vsub.s32 %v371, 127
    %v373 = vand.u32 2147483647, %v263
    %v374 = vand.u32 %v373, 8388607
    %v375 = vor.u32 %v374, 8388608
    %v376 = vsub.s32 0, %v375
    %v377 = vadd.s32 %v372, 1
    %vm378 = vcmp.gt.s32.totalorder %v377, 0
    %v379 = vsel %vm378, %v377, 0
    %v380 = vshrl.u32 %v379, 5
    %v381 = vand.u32 %v379, 31
    %v382 = vsub.s32 32, %v381
    %v383 = vshrl.u32 683565275, %v382
    %v384 = vshll.u32 683565275, %v381
    %v385 = vshrl.u32 2475754826, %v382
    %v386 = vor.u32 %v384, %v385
    %v387 = vshll.u32 2475754826, %v381
    %v388 = vshrl.u32 2131351028, %v382
    %v389 = vor.u32 %v387, %v388
    %v390 = vshll.u32 2131351028, %v381
    %v391 = vshrl.u32 2102212464, %v382
    %v392 = vor.u32 %v390, %v391
    %v393 = vshll.u32 2102212464, %v381
    %v394 = vshrl.u32 920167782, %v382
    %v395 = vor.u32 %v393, %v394
    %v396 = vshll.u32 920167782, %v381
    %v397 = vshrl.u32 1326507024, %v382
    %v398 = vor.u32 %v396, %v397
    %vm399 = vcmp.lt.s32.totalorder %v380, 1
    %vm400 = vcmp.lt.s32.totalorder %v380, 2
    %vm401 = vcmp.lt.s32.totalorder %v380, 3
    %vm402 = vcmp.lt.s32.totalorder %v380, 4
    %v403 = vsel %vm399, %v383, %v386
    %v404 = vsel %vm402, %v392, 2102212464
    %v405 = vsel %vm401, %v389, %v404
    %v406 = vsel %vm400, %v403, %v405
    %v407 = vsel %vm399, %v386, %v389
    %v408 = vsel %vm402, %v395, 920167782
    %v409 = vsel %vm401, %v392, %v408
    %v410 = vsel %vm400, %v407, %v409
    %v411 = vsel %vm399, %v389, %v392
    %v412 = vsel %vm402, %v398, 1326507024
    %v413 = vsel %vm401, %v395, %v412
    %v414 = vsel %vm400, %v411, %v413
    %v415 = vshll.u32 %v375, 8
    %v416 = vmul.u32.u64.compose %v415, %v414
    %v417 = vextract.low.u32 %v416
    %v418 = vextract.high.u32 %v416
    %v419 = vmul.u32.u64.compose %v415, %v410
    %v420 = vextract.low.u32 %v419
    %v421 = vextract.high.u32 %v419
    %v422 = vmul.u32 %v415, %v406
    %v423 = vadd.s32 %v418, %v420
    %vm424 = vc.u32 %v418, %v420
    %v425 = vadd.s32 %v421, 1
    %v426 = vsel %vm424, %v425, %v421
    %v427 = vadd.s32 %v422, %v426
    %v428 = vadd.s32 %v427, 536870912
    %v429 = vshrl.u32 %v428, 30
    %v430 = vshll.u32 %v429, 30
    %v431 = vsub.s32 %v427, %v430
    %vm432 = vcmp.lt.s32.totalorder %v431, 0
    %v433 = vsub.s32 0, %v431
    %v434 = vsel %vm432, %v433, %v431
    %v435 = vclz %v434
    %v436 = vsub.s32 %v435, 2
    %vm437 = vcmp.gt.s32.totalorder 0, %v436
    %v438 = vsel %vm437, 0, %v436
    %v439 = vsub.s32 32, %v438
    %v440 = vshll.u32 %v431, %v438
    %v441 = vshrl.u32 %v423, %v439
    %v442 = vor.u32 %v440, %v441
    %v443 = vsub.s32 4294967266, %v438
    %v444 = vadd.s32 %v443, 127
    %v445 = vshll.u32 %v444, 23
    %v446 = vor.u32 4788187, %v445
    %v447 = vand.u32 2147483647, %v446
    %v449 = vcvt.s32.f32 %v442
    %v450 = vmul.f32 %v449, %v447
    %v451 = vxor.u32 %v450, 2147483648
    %v452 = vsel %vm369, %v451, %v450
    %v453 = vsub.s32 4, %v429
    %v454 = vsel %vm369, %v453, %v429
    %v455 = vsel %vm368, %v263, %v452
    %v456 = vsel %vm368, 0, %v454
    %v457 = vcosq.f32.pop %v455
    %v458 = vsinq.f32.pop %v455
    %vm459 = vweird.f32 %v263
    %v460 = vadd.s32 %v456, 3
    %v461 = vand.u32 %v460, 3
    %vm462 = vcmp.lt.s32.totalorder %v461, 2
    %vm463 = vcmp.eq.s32.totalorder %v461, 0
    %v464 = vxor.u32 %v458, 2147483648
    %v465 = vsel %vm463, %v457, %v464
    %vm466 = vcmp.eq.s32.totalorder %v461, 2
    %v467 = vxor.u32 %v457, 2147483648
    %v468 = vsel %vm466, %v467, %v458
    %v469 = vsel %vm462, %v465, %v468
    %v470 = vsel %vm459, nan, %v469
    %v471 = vsub.f32 1.0, %v366
    %v472 = vmul.f32 %v25, %v25
    %v474 = vrot.slane %v472, 3
    %v476 = vsel %vm253, %v474, 0.0
    %v477 = vrot.slane %v476, 4
    %v478 = vadd.f32 %v476, %v477
    %v479 = vrot.slane %v478, 2
    %v480 = vadd.f32 %v478, %v479
    %v481 = vrot.slane %v480, 1
    %v482 = vadd.f32 %v480, %v481
    %v483 = vmax.f32 %v482, 1e-16
    %v484 = vrsqrt.pop %v483
    %v485 = vmul.f32 %v482, %v484
    %v486 = vand.u32 2147483647, %v485
    %vm487 = vcmp.le.f32.partialorder %v486, 0.7853982
    %vm488 = vcmp.lt.s32.totalorder %v485, 0
    %v489 = vand.u32 %v485, 2139095040
    %v490 = vshrl.u32 %v489, 23
    %v491 = vsub.s32 %v490, 127
    %v492 = vand.u32 2147483647, %v485
    %v493 = vand.u32 %v492, 8388607
    %v494 = vor.u32 %v493, 8388608
    %v495 = vsub.s32 0, %v494
    %v496 = vadd.s32 %v491, 1
    %vm497 = vcmp.gt.s32.totalorder %v496, 0
    %v498 = vsel %vm497, %v496, 0
    %v499 = vshrl.u32 %v498, 5
    %v500 = vand.u32 %v498, 31
    %v501 = vsub.s32 32, %v500
    %v502 = vshrl.u32 683565275, %v501
    %v503 = vshll.u32 683565275, %v500
    %v504 = vshrl.u32 2475754826, %v501
    %v505 = vor.u32 %v503, %v504
    %v506 = vshll.u32 2475754826, %v500
    %v507 = vshrl.u32 2131351028, %v501
    %v508 = vor.u32 %v506, %v507
    %v509 = vshll.u32 2131351028, %v500
    %v510 = vshrl.u32 2102212464, %v501
    %v511 = vor.u32 %v509, %v510
    %v512 = vshll.u32 2102212464, %v500
    %v513 = vshrl.u32 920167782, %v501
    %v514 = vor.u32 %v512, %v513
    %v515 = vshll.u32 920167782, %v500
    %v516 = vshrl.u32 1326507024, %v501
    %v517 = vor.u32 %v515, %v516
    %vm518 = vcmp.lt.s32.totalorder %v499, 1
    %vm519 = vcmp.lt.s32.totalorder %v499, 2
    %vm520 = vcmp.lt.s32.totalorder %v499, 3
    %vm521 = vcmp.lt.s32.totalorder %v499, 4
    %v522 = vsel %vm518, %v502, %v505
    %v523 = vsel %vm521, %v511, 2102212464
    %v524 = vsel %vm520, %v508, %v523
    %v525 = vsel %vm519, %v522, %v524
    %v526 = vsel %vm518, %v505, %v508
    %v527 = vsel %vm521, %v514, 920167782
    %v528 = vsel %vm520, %v511, %v527
    %v529 = vsel %vm519, %v526, %v528
    %v530 = vsel %vm518, %v508, %v511
    %v531 = vsel %vm521, %v517, 1326507024
    %v532 = vsel %vm520, %v514, %v531
    %v533 = vsel %vm519, %v530, %v532
    %v534 = vshll.u32 %v494, 8
    %v535 = vmul.u32.u64.compose %v534, %v533
    %v536 = vextract.low.u32 %v535
    %v537 = vextract.high.u32 %v535
    %v538 = vmul.u32.u64.compose %v534, %v529
    %v539 = vextract.low.u32 %v538
    %v540 = vextract.high.u32 %v538
    %v541 = vmul.u32 %v534, %v525
    %v542 = vadd.s32 %v537, %v539
    %vm543 = vc.u32 %v537, %v539
    %v544 = vadd.s32 %v540, 1
    %v545 = vsel %vm543, %v544, %v540
    %v546 = vadd.s32 %v541, %v545
    %v547 = vadd.s32 %v546, 536870912
    %v548 = vshrl.u32 %v547, 30
    %v549 = vshll.u32 %v548, 30
    %v550 = vsub.s32 %v546, %v549
    %vm551 = vcmp.lt.s32.totalorder %v550, 0
    %v552 = vsub.s32 0, %v550
    %v553 = vsel %vm551, %v552, %v550
    %v554 = vclz %v553
    %v555 = vsub.s32 %v554, 2
    %vm556 = vcmp.gt.s32.totalorder 0, %v555
    %v557 = vsel %vm556, 0, %v555
    %v558 = vsub.s32 32, %v557
    %v559 = vshll.u32 %v550, %v557
    %v560 = vshrl.u32 %v542, %v558
    %v561 = vor.u32 %v559, %v560
    %v562 = vsub.s32 4294967266, %v557
    %v563 = vadd.s32 %v562, 127
    %v564 = vshll.u32 %v563, 23
    %v565 = vor.u32 4788187, %v564
    %v566 = vand.u32 2147483647, %v565
    %v568 = vcvt.s32.f32 %v561
    %v569 = vmul.f32 %v568, %v566
    %v570 = vxor.u32 %v569, 2147483648
    %v571 = vsel %vm488, %v570, %v569
    %v572 = vsub.s32 4, %v548
    %v573 = vsel %vm488, %v572, %v548
    %v574 = vsel %vm487, %v485, %v571
    %v575 = vsel %vm487, 0, %v573
    %v576 = vcosq.f32.pop %v574
    %v577 = vsinq.f32.pop %v574
    %vm578 = vweird.f32 %v485
    %v579 = vand.u32 %v575, 3
    %vm580 = vcmp.lt.s32.totalorder %v579, 2
    %vm581 = vcmp.eq.s32.totalorder %v579, 0
    %v582 = vxor.u32 %v577, 2147483648
    %v583 = vsel %vm581, %v576, %v582
    %vm584 = vcmp.eq.s32.totalorder %v579, 2
    %v585 = vxor.u32 %v576, 2147483648
    %v586 = vsel %vm584, %v585, %v577
    %v587 = vsel %vm580, %v583, %v586
    %v588 = vsel %vm578, nan, %v587
    %v589 = vand.u32 2147483647, %v485
    %vm590 = vcmp.le.f32.partialorder %v589, 0.7853982
    %vm591 = vcmp.lt.s32.totalorder %v485, 0
    %v592 = vand.u32 %v485, 2139095040
    %v593 = vshrl.u32 %v592, 23
    %v594 = vsub.s32 %v593, 127
    %v595 = vand.u32 2147483647, %v485
    %v596 = vand.u32 %v595, 8388607
    %v597 = vor.u32 %v596, 8388608
    %v598 = vsub.s32 0, %v597
    %v599 = vadd.s32 %v594, 1
    %vm600 = vcmp.gt.s32.totalorder %v599, 0
    %v601 = vsel %vm600, %v599, 0
    %v602 = vshrl.u32 %v601, 5
    %v603 = vand.u32 %v601, 31
    %v604 = vsub.s32 32, %v603
    %v605 = vshrl.u32 683565275, %v604
    %v606 = vshll.u32 683565275, %v603
    %v607 = vshrl.u32 2475754826, %v604
    %v608 = vor.u32 %v606, %v607
    %v609 = vshll.u32 2475754826, %v603
    %v610 = vshrl.u32 2131351028, %v604
    %v611 = vor.u32 %v609, %v610
    %v612 = vshll.u32 2131351028, %v603
    %v613 = vshrl.u32 2102212464, %v604
    %v614 = vor.u32 %v612, %v613
    %v615 = vshll.u32 2102212464, %v603
    %v616 = vshrl.u32 920167782, %v604
    %v617 = vor.u32 %v615, %v616
    %v618 = vshll.u32 920167782, %v603
    %v619 = vshrl.u32 1326507024, %v604
    %v620 = vor.u32 %v618, %v619
    %vm621 = vcmp.lt.s32.totalorder %v602, 1
    %vm622 = vcmp.lt.s32.totalorder %v602, 2
    %vm623 = vcmp.lt.s32.totalorder %v602, 3
    %vm624 = vcmp.lt.s32.totalorder %v602, 4
    %v625 = vsel %vm621, %v605, %v608
    %v626 = vsel %vm624, %v614, 2102212464
    %v627 = vsel %vm623, %v611, %v626
    %v628 = vsel %vm622, %v625, %v627
    %v629 = vsel %vm621, %v608, %v611
    %v630 = vsel %vm624, %v617, 920167782
    %v631 = vsel %vm623, %v614, %v630
    %v632 = vsel %vm622, %v629, %v631
    %v633 = vsel %vm621, %v611, %v614
    %v634 = vsel %vm624, %v620, 1326507024
    %v635 = vsel %vm623, %v617, %v634
    %v636 = vsel %vm622, %v633, %v635
    %v637 = vshll.u32 %v597, 8
    %v638 = vmul.u32.u64.compose %v637, %v636
    %v639 = vextract.low.u32 %v638
    %v640 = vextract.high.u32 %v638
    %v641 = vmul.u32.u64.compose %v637, %v632
    %v642 = vextract.low.u32 %v641
    %v643 = vextract.high.u32 %v641
    %v644 = vmul.u32 %v637, %v628
    %v645 = vadd.s32 %v640, %v642
    %vm646 = vc.u32 %v640, %v642
    %v647 = vadd.s32 %v643, 1
    %v648 = vsel %vm646, %v647, %v643
    %v649 = vadd.s32 %v644, %v648
    %v650 = vadd.s32 %v649, 536870912
    %v651 = vshrl.u32 %v650, 30
    %v652 = vshll.u32 %v651, 30
    %v653 = vsub.s32 %v649, %v652
    %vm654 = vcmp.lt.s32.totalorder %v653, 0
    %v655 = vsub.s32 0, %v653
    %v656 = vsel %vm654, %v655, %v653
    %v657 = vclz %v656
    %v658 = vsub.s32 %v657, 2
    %vm659 = vcmp.gt.s32.totalorder 0, %v658
    %v660 = vsel %vm659, 0, %v658
    %v661 = vsub.s32 32, %v660
    %v662 = vshll.u32 %v653, %v660
    %v663 = vshrl.u32 %v645, %v661
    %v664 = vor.u32 %v662, %v663
    %v665 = vsub.s32 4294967266, %v660
    %v666 = vadd.s32 %v665, 127
    %v667 = vshll.u32 %v666, 23
    %v668 = vor.u32 4788187, %v667
    %v669 = vand.u32 2147483647, %v668
    %v671 = vcvt.s32.f32 %v664
    %v672 = vmul.f32 %v671, %v669
    %v673 = vxor.u32 %v672, 2147483648
    %v674 = vsel %vm591, %v673, %v672
    %v675 = vsub.s32 4, %v651
    %v676 = vsel %vm591, %v675, %v651
    %v677 = vsel %vm590, %v485, %v674
    %v678 = vsel %vm590, 0, %v676
    %v679 = vcosq.f32.pop %v677
    %v680 = vsinq.f32.pop %v677
    %vm681 = vweird.f32 %v485
    %v682 = vadd.s32 %v678, 3
    %v683 = vand.u32 %v682, 3
    %vm684 = vcmp.lt.s32.totalorder %v683, 2
    %vm685 = vcmp.eq.s32.totalorder %v683, 0
    %v686 = vxor.u32 %v680, 2147483648
    %v687 = vsel %vm685, %v679, %v686
    %vm688 = vcmp.eq.s32.totalorder %v683, 2
    %v689 = vxor.u32 %v679, 2147483648
    %v690 = vsel %vm688, %v689, %v680
    %v691 = vsel %vm684, %v687, %v690
    %v692 = vsel %vm681, nan, %v691
    %v693 = vsub.f32 1.0, %v588
    %v695 = vrot.slane %v25, 3
    %v697 = vmul.f32 %v250, %v695
    %v698 = vsel %vm253, %v697, 0.0
    %v699 = vrot.slane %v698, 4
    %v700 = vadd.f32 %v698, %v699
    %v701 = vrot.slane %v700, 2
    %v702 = vadd.f32 %v700, %v701
    %v703 = vrot.slane %v702, 1
    %v704 = vadd.f32 %v702, %v703
    %v705 = vmul.f32 %v262, %v484
    %v706 = vmul.f32 %v704, %v705
    %v707 = vmul.f32 %v366, 3.0
    %v708 = vmul.f32 %v707, %v588
    %v709 = vmul.f32 %v366, %v693
    %v710 = vadd.f32 %v708, %v709
    %v711 = vmul.f32 %v471, %v588
    %v712 = vadd.f32 %v710, %v711
    %v713 = vmul.f32 %v470, 2.0
    %v714 = vmul.f32 %v713, %v692
    %v715 = vmul.f32 %v714, %v706
    %v716 = vadd.f32 %v712, %v715
    %v717 = vmul.f32 %v471, %v693
    %v718 = vmul.f32 %v717, %v706
    %v719 = vmul.f32 %v718, %v706
    %v720 = vadd.f32 %v716, %v719
    %v721 = vsub.f32 3.0, %v720
    %vm723 = vcmask 1044480
    %v724 = vrot.slane %v26, 3
    %v725 = vsel %vm723, %v695, %v724
    %v727 = vsub.f32 %v251, %v725
    %v728 = vmul.f32 %v727, %v727
    %v730 = vrot.slane %v728, 3
    %v732 = vsel %vm253, %v730, 0.0
    %v733 = vrot.slane %v732, 4
    %v734 = vadd.f32 %v732, %v733
    %v735 = vrot.slane %v734, 2
    %v736 = vadd.f32 %v734, %v735
    %v737 = vrot.slane %v736, 1
    %v738 = vadd.f32 %v736, %v737
    %v739 = vmax.f32 %v230, %v233
    %v740 = vrot.slane %v739, 4
    %v741 = vmax.f32 %v739, %v740
    %v742 = vrot.slane %v741, 2
    %v743 = vmax.f32 %v741, %v742
    %v744 = vrot.slane %v743, 1
    %v745 = vmax.f32 %v743, %v744
    %v746 = vsub.f32 %v230, %v745
    %v747 = vsub.f32 %v233, %v745
    %v748 = vmul.f32 %v746, 1.442695
    %v749 = vpow.pop %v748
    %v750 = vmul.f32 %v747, 1.442695
    %v751 = vpow.pop %v750
    %v752 = vadd.f32 %v749, %v751
    %v753 = vrot.slane %v752, 4
    %v754 = vadd.f32 %v752, %v753
    %v755 = vrot.slane %v754, 2
    %v756 = vadd.f32 %v754, %v755
    %v757 = vrot.slane %v756, 1
    %v758 = vadd.f32 %v756, %v757
    %v759 = vlog2.pop %v758
    %v760 = vmul.f32 %v759, 0.6931472
    %v761 = vadd.f32 %v745, %v760
    %v762 = vlaneseq
    %v763 = vshrl.u32 %v762, 7
    %v764 = vadd.s32 %v763, 8
    %v765 = vcvt.s32.f32 %v763
    %v766 = vcvt.s32.f32 %v764
    %v767 = vlaneseq
    %v768 = vshrl.u32 %v767, 7
    %v769 = vsub.s32 1, %v768
    %v770 = vrot.slane %v26, %v769
    %vm771 = vcmp.eq.f32.partialorder %v765, %v770
    %vm772 = vcmp.eq.f32.partialorder %v766, %v770
    %v773 = vsel %vm771, 1, 0
    %v774 = vsel %vm772, 1, 0
    %v775 = vcvt.s32.f32 %v773
    %v776 = vcvt.s32.f32 %v774
    %v777 = vmul.f32 %v230, %v775
    %v778 = vmul.f32 %v233, %v776
    %v779 = vadd.f32 %v777, %v778
    %v780 = vrot.slane %v779, 4
    %v781 = vadd.f32 %v779, %v780
    %v782 = vrot.slane %v781, 2
    %v783 = vadd.f32 %v781, %v782
    %v784 = vrot.slane %v783, 1
    %v785 = vadd.f32 %v783, %v784
    %v786 = vsub.f32 %v761, %v785
    %v787 = vmul.f32 %v721, %v26
    %v789 = vrot.slane %v787, 2
    %vm791 = vcmask 1040384
    %v792 = vsel %vm791, %v789, 0.0
    %793 = vadd.xlane.f32.xlu0 %v792
    %v794 = vpop.xlane.xlu0 %793
    %v795 = vrot.slane %v794, 4
    %v796 = vadd.f32 %v794, %v795
    %v797 = vrot.slane %v796, 2
    %v798 = vadd.f32 %v796, %v797
    %v799 = vrot.slane %v798, 1
    %v800 = vadd.f32 %v798, %v799
    %s801 = vtos %v800
    %v802 = vrot.slane %v26, 2
    %v804 = vsel %vm791, %v802, 0.0
    %805 = vadd.xlane.f32.xlu0 %v804
    %v806 = vpop.xlane.xlu0 %805
    %v807 = vrot.slane %v806, 4
    %v808 = vadd.f32 %v806, %v807
    %v809 = vrot.slane %v808, 2
    %v810 = vadd.f32 %v808, %v809
    %v811 = vrot.slane %v810, 1
    %v812 = vadd.f32 %v810, %v811
    %s813 = vtos %v812
    %v814 = vmul.f32 %v738, %v26
    %v816 = vrot.slane %v814, 3
    %v818 = vsel %vm791, %v816, 0.0
    %819 = vadd.xlane.f32.xlu0 %v818
    %v820 = vpop.xlane.xlu0 %819
    %v821 = vrot.slane %v820, 4
    %v822 = vadd.f32 %v820, %v821
    %v823 = vrot.slane %v822, 2
    %v824 = vadd.f32 %v822, %v823
    %v825 = vrot.slane %v824, 1
    %v826 = vadd.f32 %v824, %v825
    %s827 = vtos %v826
    %v829 = vsel %vm791, %v724, 0.0
    %830 = vadd.xlane.f32.xlu0 %v829
    %v831 = vpop.xlane.xlu0 %830
    %v832 = vrot.slane %v831, 4
    %v833 = vadd.f32 %v831, %v832
    %v834 = vrot.slane %v833, 2
    %v835 = vadd.f32 %v833, %v834
    %v836 = vrot.slane %v835, 1
    %v837 = vadd.f32 %v835, %v836
    %s838 = vtos %v837
    %v839 = vmul.f32 %v786, %v26
    %v841 = vrot.slane %v839, 4
    %v843 = vsel %vm791, %v841, 0.0
    %844 = vadd.xlane.f32.xlu0 %v843
    %v845 = vpop.xlane.xlu0 %844
    %v846 = vrot.slane %v845, 4
    %v847 = vadd.f32 %v845, %v846
    %v848 = vrot.slane %v847, 2
    %v849 = vadd.f32 %v847, %v848
    %v850 = vrot.slane %v849, 1
    %v851 = vadd.f32 %v849, %v850
    %s852 = vtos %v851
    %v853 = vrot.slane %v26, 4
    %v855 = vsel %vm791, %v853, 0.0
    %856 = vadd.xlane.f32.xlu0 %v855
    %v857 = vpop.xlane.xlu0 %856
    %v858 = vrot.slane %v857, 4
    %v859 = vadd.f32 %v857, %v858
    %v860 = vrot.slane %v859, 2
    %v861 = vadd.f32 %v859, %v860
    %v862 = vrot.slane %v861, 1
    %v863 = vadd.f32 %v861, %v862
    %s864 = vtos %v863
    %v865 = vstv %s801
    %v866 = vstv %s813
    %v867 = vstv %s827
    %v868 = vstv %s838
    %v869 = vstv %s852
    %v870 = vstv %s864
    %v871 = vsel %vm791, %v865, %v866
    %vm872 = vcmask 1041408
    %v873 = vsel %vm872, %v871, %v867
    %v874 = vsel %vm253, %v873, %v868
    %vm875 = vcmask 1043456
    %v876 = vsel %vm875, %v874, %v869
    %v877 = vsel %vm723, %v876, %v870
    %vm878 = vcmask 1045504
    %v879 = vsel %vm878, %v877, 0.0
    %vm880 = vcmask 1046528
    %v881 = vsel %vm880, %v879, 0.0
    %882 = vst [vmem:[#allocation2] sm:$0xff] %v881
    // Predicated region
    $region26: #{tpu_custom_call.1} parent=1 // pred_check
      _
    $region27: #{tpu_custom_call.1} parent=1 // pred_check_branch
      %884 = sbr.rel (0) target = $region29
    $region28: #{tpu_custom_call.1} parent=1 // pred_region
      %s886 = ssub.s32 128, 128
      %887 = vsyncadd [#allocation3], %s886
      %s889 = sshll.u32 [#allocation2], 4
      %s890 = int_to_ptr.vmem [resolvable:$true] %s889
      %892 = dma.vmem_to_hbm [thread:$0]  %s890, 128, %s6, [#allocation3]
    $region29: #{tpu_custom_call.1} parent=1 // pred_fallthru
      _
    // Predicated region
    $region30: #{tpu_custom_call.1} parent=1 // pred_check
      _
    $region31: #{tpu_custom_call.1} parent=1 // pred_check_branch
      %894 = sbr.rel (0) target = $region33
    $region32: #{tpu_custom_call.1} parent=1 // pred_region
      %895 = dma.done [#allocation3], 128
    $region33: #{tpu_custom_call.1} parent=1 // pred_fallthru
      _
    %896 = vsyncpa [#allocation3], 1

</llo_original>
